<compile_context>
chip_gen: v7x
topology: tpu7x:2x2x1
jax: 0.10.0
libtpu: 0.0.40
codegen_flags: <defaults>
</compile_context>

<pallas_src>
import jax
import jax.numpy as jnp
from jax import lax
from jax.experimental import pallas as pl
from jax.experimental.pallas import tpu as pltpu


def _clip_loss_tile_kernel(scale_ref, img_ref, txt_ref, stats_ref):
    # scale_ref: (1,) f32 in SMEM, holds exp(logit_scale).
    # img_ref:   (TILE_M, D) row tile of image embeddings (input dtype).
    # txt_ref:   (N, D) full text embeddings, resident across the grid.
    # stats_ref: (1, 3, N) f32 out slab:
    #            row 0 = per-tile column log-sum-exp
    #            row 1 = per-tile column max (underflow floor)
    #            row 2 = broadcast scalar partial = 0.5*sum(row_lse) - sum(diag)
    tile_m = img_ref.shape[0]
    n = txt_ref.shape[0]
    scale = scale_ref[0]                                      # f32 scalar

    img = img_ref[...]                                        # (TM, D) native dtype
    txt = txt_ref[...]                                        # (N, D)  native dtype

    # Fold the logit scale into the small operand, in the *input* dtype so the
    # MXU sees its native bf16/f32 path (f32 accumulation below).
    img_s = img * scale.astype(img.dtype)                     # (TM, D)

    # logits[i, j] = scale * <img_i, txt_j>; contract last dims (no txt.T).
    logits = lax.dot_general(
        img_s, txt,
        dimension_numbers=(((1,), (1,)), ((), ())),
        preferred_element_type=jnp.float32)                   # (TM, N) f32

    # Row log-sum-exp (image -> text direction): the single O(TM*N) exp pass.
    row_max = jnp.max(logits, axis=1, keepdims=True)          # (TM, 1)
    e = jnp.exp(logits - row_max)                             # (TM, N) EUP
    row_lse = jnp.log(jnp.sum(e, axis=1, keepdims=True)) + row_max   # (TM, 1)

    # Per-tile column log-sum-exp recovered from the SAME E with a rank-1 MXU
    # matvec (TM*N MACs = 1/D of the main matmul; only O(TM) extra exps):
    #   col_sum_j = sum_i exp(logits_ij - c) = exp(row_max - c)^T @ E
    c = jnp.max(row_max, keepdims=True)                       # (1, 1) tile max
    r = jnp.exp(row_max - c).reshape(1, tile_m)               # (1, TM)
    col_sum = lax.dot_general(
        r, e,
        dimension_numbers=(((1,), (0,)), ((), ())),
        preferred_element_type=jnp.float32)                   # (1, N)
    col_lse = jnp.log(col_sum) + c                            # (1, N); -inf if underflow

    # Per-tile column max (XLU reduce, no exp) -> underflow floor for wrapper.
    col_max = jnp.max(logits, axis=0, keepdims=True)          # (1, N)

    # Diagonal terms for this tile, accumulated in f32:
    #   logits[i, i] = scale * <img_i, txt_i>.
    start = pl.multiple_of(pl.program_id(0) * tile_m, tile_m)
    txt_rows = txt_ref[pl.ds(start, tile_m), :]                # (TM, D)
    diag = scale * jnp.sum(img.astype(jnp.float32) * txt_rows.astype(jnp.float32),
                           axis=1, keepdims=True)              # (TM, 1)

    partial = (0.5 * jnp.sum(row_lse, axis=0, keepdims=True)
               - jnp.sum(diag, axis=0, keepdims=True))         # (1, 1)

    packed = jnp.concatenate(
        [col_lse, col_max, jnp.broadcast_to(partial, (1, n))], axis=0)   # (3, N)
    stats_ref[...] = packed.reshape(1, 3, n)


def _vmem_capacity_bytes():
    """Physical VMEM for this generation (128 MiB v5e/v6e, 64 MiB/TC v7x)."""
    try:
        return int(pltpu.get_tpu_info().vmem_capacity_bytes)
    except Exception:
        return 64 * 1024 * 1024   # conservative fallback (v7x per-TC)


def _vmem_estimate_bytes(N, D, tile_m, in_itemsize):
    txt_resident = N * D * in_itemsize            # resident text, single-buffered
    img_bufs = 2 * tile_m * D * in_itemsize       # double-buffered image tile
    out_bufs = 2 * 3 * N * 4                      # double-buffered (1,3,N) f32 stats
    work = 4 * 3 * tile_m * N                     # logits + E + f32 temporaries
    return txt_resident + img_bufs + out_bufs + work


def _pick_tile_m(N, D, in_itemsize, vmem_cap):
    """Largest row tile (multiple of 8, dividing N) whose full working set --
    including the resident text block -- fits ~80% of this chip's VMEM."""
    budget = min(int(vmem_cap * 0.80), vmem_cap - (8 << 20))
    candidates = [t for t in (1024, 512, 256, 128, 64, 32, 16, 8)
                  if t <= N and N % t == 0]
    if not candidates:
        return N
    for tm in candidates:
        if _vmem_estimate_bytes(N, D, tm, in_itemsize) <= budget:
            return tm
    # TODO(synk): for very large N (resident txt alone over the v7x budget) add
    # a second "arbitrary" grid axis over text column tiles with flash-style
    # online row-max/row-sum accumulation.
    return candidates[-1]


def clip_contrastive_loss(image_embeddings, text_embeddings, logit_scale, *, tile_m=None):
    """image_embeddings, text_embeddings: (N, D), l2-normalized (any float dtype).
    logit_scale: scalar parameter in log-space (as in the PyTorch module)."""
    N, D = image_embeddings.shape
    assert text_embeddings.shape == (N, D)

    in_itemsize = jnp.dtype(image_embeddings.dtype).itemsize
    vmem_cap = _vmem_capacity_bytes()
    if tile_m is None:
        tile_m = _pick_tile_m(N, D, in_itemsize, vmem_cap)
    assert N % tile_m == 0, (N, tile_m)
    num_tiles = N // tile_m

    vmem_limit = int(min(
        vmem_cap,
        max(_vmem_estimate_bytes(N, D, tile_m, in_itemsize) + (8 << 20), 32 << 20)))

    # exp() of the scalar parameter (same first op as the PyTorch forward);
    # passed through SMEM as a ready-to-use multiplier.
    scale = jnp.exp(logit_scale.astype(jnp.float32)).reshape(1)

    stats = pl.pallas_call(
        _clip_loss_tile_kernel,
        out_shape=jax.ShapeDtypeStruct((num_tiles, 3, N), jnp.float32),
        grid=(num_tiles,),
        in_specs=[
            pl.BlockSpec(memory_space=pltpu.MemorySpace.SMEM),      # exp(logit_scale)
            pl.BlockSpec((tile_m, D), lambda i: (i, 0)),            # img row tile
            pl.BlockSpec((N, D), lambda i: (0, 0),
                         pipeline_mode=pl.Buffered(1)),             # resident txt, 1 buffer
        ],
        out_specs=pl.BlockSpec((1, 3, N), lambda i: (i, 0, 0)),
        compiler_params=pltpu.CompilerParams(
            dimension_semantics=("parallel",),
            vmem_limit_bytes=vmem_limit,
        ),
    )(scale, image_embeddings, text_embeddings)

    col_lse_tiles = stats[:, 0, :]          # (num_tiles, N)
    col_max_tiles = stats[:, 1, :]          # (num_tiles, N)
    partials = stats[:, 2, 0]               # (num_tiles,)

    # Cheap cross-tile combine in plain XLA: column LSE over the row tiles.
    col_lse = jax.nn.logsumexp(col_lse_tiles, axis=0)                  # (N,)
    # Underflow guard: LSE >= max always; if the rank-1 rescale underflowed in
    # every tile (very large logit_scale), this recovers a finite, tight bound.
    col_lse = jnp.maximum(col_lse, jnp.max(col_max_tiles, axis=0))

    total = jnp.sum(partials) + 0.5 * jnp.sum(col_lse)
    return total / jnp.float32(N)


def _reference_loss(img, txt, logit_scale):
    logits = jnp.exp(logit_scale) * img @ txt.T
    lse_rows = jax.nn.logsumexp(logits, axis=1)
    lse_cols = jax.nn.logsumexp(logits, axis=0)
    diag = jnp.diag(logits)
    loss_i2t = jnp.mean(lse_rows - diag)
    loss_t2i = jnp.mean(lse_cols - diag)
    return (loss_i2t + loss_t2i) / 2.0


if __name__ == "__main__":
    N, D = 128, 64

    key = jax.random.PRNGKey(0)
    k_img, k_txt = jax.random.split(key)
    img = jax.random.normal(k_img, (N, D), dtype=jnp.float32)
    txt = jax.random.normal(k_txt, (N, D), dtype=jnp.float32)

    # l2-normalize, as the module's contract assumes.
    img = img / jnp.linalg.norm(img, axis=-1, keepdims=True)
    txt = txt / jnp.linalg.norm(txt, axis=-1, keepdims=True)

    # nn.Parameter(ones([]) * log(1/0.07)) -- deterministic init.
    logit_scale = jnp.array(jnp.log(1.0 / 0.07), dtype=jnp.float32)

    # tile_m=32 forces a 4-step grid so the multi-tile / cross-tile combine
    # path (and the underflow floor) is exercised even at this small size.
    loss = clip_contrastive_loss(img, txt, logit_scale, tile_m=32)
    jax.block_until_ready(loss)

    ref = _reference_loss(img, txt, logit_scale)
    assert jnp.allclose(loss, ref, rtol=1e-4, atol=1e-4), (loss, ref)

    print("KERNEL_OK")
</pallas_src>

<mosaic_0001>
module attributes {stable_mosaic.version = 11 : i64} {
  func.func @_clip_loss_tile_kernel(%arg0: i32, %arg1: memref<1xf32, #tpu.memory_space<smem>>, %arg2: memref<32x64xf32, #tpu.memory_space<vmem>>, %arg3: memref<128x64xf32, #tpu.memory_space<vmem>>, %arg4: memref<1x3x128xf32, #tpu.memory_space<vmem>>) attributes {dimension_semantics = [#tpu.dimension_semantics<parallel>], iteration_bounds = array<i64: 4>, scalar_prefetch = 0 : i64, scratch_operands = 0 : i64, tpu.core_type = #tpu.core_type<tc>, window_params = [{transform_indices = @transform_0, window_bounds = array<i64: 1>}, {transform_indices = @transform_1, window_bounds = array<i64: 32, 64>}, {pipeline_mode = #tpu.pipeline_mode<synchronous>, transform_indices = @transform_2, window_bounds = array<i64: 128, 64>}, {transform_indices = @transform_3, window_bounds = array<i64: 1, 3, 128>}]} {
    %c0 = arith.constant 0 : index
    %0 = memref.load %arg1[%c0] : memref<1xf32, #tpu.memory_space<smem>>
    %c0_0 = arith.constant 0 : index
    %c0_1 = arith.constant 0 : index
    %1 = vector.load %arg2[%c0_0, %c0_1] : memref<32x64xf32, #tpu.memory_space<vmem>>, vector<32x64xf32>
    %c0_2 = arith.constant 0 : index
    %c0_3 = arith.constant 0 : index
    %2 = vector.load %arg3[%c0_2, %c0_3] : memref<128x64xf32, #tpu.memory_space<vmem>>, vector<128x64xf32>
    %3 = vector.broadcast %0 : f32 to vector<32x64xf32>
    %4 = arith.mulf %1, %3 : vector<32x64xf32>
    %cst = arith.constant dense<0.000000e+00> : vector<32x128xf32>
    %5 = tpu.matmul %4, %2, %cst {dimension_numbers = #tpu.dot_dimension_numbers<[1], [1], [0], [0], [0, 0, 1, 0], [], []>} : vector<32x64xf32>, vector<128x64xf32>, vector<32x128xf32> -> vector<32x128xf32>
    %cst_4 = arith.constant dense<0xFF800000> : vector<32xf32>
    %6 = vector.multi_reduction <maximumf>, %5, %cst_4 [1] : vector<32x128xf32> to vector<32xf32>
    %7 = vector.shape_cast %6 : vector<32xf32> to vector<32x1xf32>
    %8 = vector.broadcast %7 : vector<32x1xf32> to vector<32x128xf32>
    %9 = arith.subf %5, %8 : vector<32x128xf32>
    %10 = math.exp %9 : vector<32x128xf32>
    %cst_5 = arith.constant dense<0.000000e+00> : vector<32xf32>
    %11 = vector.multi_reduction <add>, %10, %cst_5 [1] : vector<32x128xf32> to vector<32xf32>
    %12 = vector.shape_cast %11 : vector<32xf32> to vector<32x1xf32>
    %13 = math.log %12 : vector<32x1xf32>
    %14 = arith.addf %13, %7 : vector<32x1xf32>
    %15 = vector.shape_cast %7 : vector<32x1xf32> to vector<1x32x1xf32>
    %cst_6 = arith.constant dense<0xFF800000> : vector<1xf32>
    %16 = vector.multi_reduction <maximumf>, %15, %cst_6 [1, 2] : vector<1x32x1xf32> to vector<1xf32>
    %17 = vector.shape_cast %16 : vector<1xf32> to vector<1x1x1xf32>
    %18 = vector.extract %17[0, 0, 0] : f32 from vector<1x1x1xf32>
    %19 = vector.broadcast %18 : f32 to vector<1x1xf32>
    %20 = vector.broadcast %19 : vector<1x1xf32> to vector<32x1xf32>
    %21 = arith.subf %7, %20 : vector<32x1xf32>
    %22 = math.exp %21 : vector<32x1xf32>
    %23 = vector.shape_cast %22 : vector<32x1xf32> to vector<1x32xf32>
    %cst_7 = arith.constant dense<0.000000e+00> : vector<1x128xf32>
    %24 = tpu.matmul %23, %10, %cst_7 {dimension_numbers = #tpu.dot_dimension_numbers<[1], [0], [0], [1], [0, 0, 1, 1], [], []>} : vector<1x32xf32>, vector<32x128xf32>, vector<1x128xf32> -> vector<1x128xf32>
    %25 = math.log %24 : vector<1x128xf32>
    %26 = vector.broadcast %19 : vector<1x1xf32> to vector<1x128xf32>
    %27 = arith.addf %25, %26 : vector<1x128xf32>
    %cst_8 = arith.constant dense<0xFF800000> : vector<128xf32>
    %28 = vector.multi_reduction <maximumf>, %5, %cst_8 [0] : vector<32x128xf32> to vector<128xf32>
    %29 = vector.shape_cast %28 : vector<128xf32> to vector<1x128xf32>
    %c32_i32 = arith.constant 32 : i32
    %30 = arith.muli %arg0, %c32_i32 : i32
    %31 = tpu.assume_multiple %30, 32 : i32
    %32 = arith.index_cast %31 : i32 to index
    %c0_9 = arith.constant 0 : index
    %33 = vector.load %arg3[%32, %c0_9] : memref<128x64xf32, #tpu.memory_space<vmem>>, vector<32x64xf32>
    %34 = arith.mulf %1, %33 : vector<32x64xf32>
    %cst_10 = arith.constant dense<0.000000e+00> : vector<32xf32>
    %35 = vector.multi_reduction <add>, %34, %cst_10 [1] : vector<32x64xf32> to vector<32xf32>
    %36 = vector.shape_cast %35 : vector<32xf32> to vector<32x1xf32>
    %37 = vector.broadcast %0 : f32 to vector<32x1xf32>
    %38 = arith.mulf %37, %36 : vector<32x1xf32>
    %cst_11 = arith.constant dense<0.000000e+00> : vector<1xf32>
    %39 = vector.multi_reduction <add>, %14, %cst_11 [0] : vector<32x1xf32> to vector<1xf32>
    %40 = vector.shape_cast %39 : vector<1xf32> to vector<1x1xf32>
    %cst_12 = arith.constant 5.000000e-01 : f32
    %41 = vector.broadcast %cst_12 : f32 to vector<1x1xf32>
    %42 = arith.mulf %41, %40 : vector<1x1xf32>
    %cst_13 = arith.constant dense<0.000000e+00> : vector<1xf32>
    %43 = vector.multi_reduction <add>, %38, %cst_13 [0] : vector<32x1xf32> to vector<1xf32>
    %44 = vector.shape_cast %43 : vector<1xf32> to vector<1x1xf32>
    %45 = arith.subf %42, %44 : vector<1x1xf32>
    %46 = vector.shape_cast %45 : vector<1x1xf32> to vector<1x1xf32>
    %47 = vector.broadcast %46 : vector<1x1xf32> to vector<1x128xf32>
    %48 = tpu.concatenate %27, %29, %47 in 0 : vector<1x128xf32>, vector<1x128xf32>, vector<1x128xf32> -> vector<3x128xf32>
    %49 = vector.shape_cast %48 : vector<3x128xf32> to vector<1x3x128xf32>
    %c0_14 = arith.constant 0 : index
    %c0_15 = arith.constant 0 : index
    %c0_16 = arith.constant 0 : index
    %50 = vector.load %arg4[%c0_14, %c0_15, %c0_16] : memref<1x3x128xf32, #tpu.memory_space<vmem>>, vector<1x3x128xf32>
    tpu.vector_store %arg4[%c0_14, %c0_15, %c0_16], %49 {strides = array<i32>} : memref<1x3x128xf32, #tpu.memory_space<vmem>>, vector<1x3x128xf32>,
    return
  }
  func.func @transform_0(%arg0: i32) -> i32 {
    %c0_i32 = arith.constant 0 : i32
    %c0_i32_0 = arith.constant 0 : i32
    return %c0_i32 : i32
  }
  func.func @transform_1(%arg0: i32) -> (i32, i32) {
    %c0_i32 = arith.constant 0 : i32
    %c0_i32_0 = arith.constant 0 : i32
    return %arg0, %c0_i32 : i32, i32
  }
  func.func @transform_2(%arg0: i32) -> (i32, i32) {
    %c0_i32 = arith.constant 0 : i32
    %c0_i32_0 = arith.constant 0 : i32
    %c0_i32_1 = arith.constant 0 : i32
    return %c0_i32, %c0_i32_0 : i32, i32
  }
  func.func @transform_3(%arg0: i32) -> (i32, i32, i32) {
    %c0_i32 = arith.constant 0 : i32
    %c0_i32_0 = arith.constant 0 : i32
    %c0_i32_1 = arith.constant 0 : i32
    return %arg0, %c0_i32, %c0_i32_0 : i32, i32, i32
  }
}

</mosaic_0001>

<llo_original>
// kernel: tpu_custom_call.1
$region0: #{tpu_custom_call.1}
  #allocation0 [shape = 'u32[]', space=smem, size = 0x4, offset = 0x4, fixed_abs, tag = 'smem constant byte address 0x4 - core index']
  #allocation1 [shape = 'u32[144,128]{1,0:T(1,128)}', space=vmem, size = 0x12000, scoped, tag = 'internal scratch']
  #allocation2 [shape = 'f32[1]{0:T(128)S(6)}', space=smem, size = 0x200, scoped, tag = 'scoped memory for tpu_custom_call.1']
  %s0 = inlined_call_operand.<no memory space> [shape: f32[1], index: 0, kind: input, shape index: {}]
  %s1 = inlined_call_operand.vmem [shape: f32[128,64], index: 1, kind: input, shape index: {}]
  %s2 = inlined_call_operand.vmem [shape: f32[128,64], index: 2, kind: input, shape index: {}]
  %s3 = inlined_call_operand.vmem [shape: f32[4,3,128], index: 3, kind: output, shape index: {}]
  %s4 = sld [smem:[#allocation0]]
  $region45: #{tpu_custom_call.1} parent=0
    _
  %s6 = ssub.s32 1, %s4
  %s7 = scalar_select 0, %s6, %s4
  %8 = sst [smem:[#allocation2]] %s0
  loop: start=0, step=1, limit=6
  $region2: #{tpu_custom_call.1} parent=0 // loop_pre_header
    _
  $region3: #{tpu_custom_call.1} parent=0 // loop_header
    %s10 = sphi 0, %s14
    %p11 = scmp.ge.s32.totalorder %s10, 6
    %s18 = sphi 0, %s18
    %s20 = sphi 0, %s18
    %s21 = sphi 0, %s20
    %s35 = sphi 0, %s21
    %s41 = sphi 0, %s43
    %s44 = sphi 0, %s41
    %s45 = sphi 0, %s44
    %s61 = sphi 0, %s45
    %s65 = sphi 0, %s65
    %s67 = sphi 0, %s65
    %s68 = sphi 0, %s67
    %s82 = sphi 0, %s68
    %s88 = sphi 0, %s90
    %s91 = sphi 0, %s88
    %s92 = sphi 0, %s91
    %s108 = sphi 0, %s92
  $region4: #{tpu_custom_call.1} parent=0 // loop_header_branch
    %13 = sbr.rel (%p11) target = $region8
  $region5: #{tpu_custom_call.1} parent=0 // loop_body
    %s15 = ssub.s32 %s10, 1
    %s16 = ssub.s32 %s10, 2
    %s17 = sadd.s32 %s10, 1
    %s19 = sadd.s32 %s18, 1
    %p22 = scmp.eq.s32.totalorder %s10, 3
    %p23 = scmp.ne.s32.totalorder %s18, %s20
    %p24 = scmp.eq.s32.totalorder %s10, 0
    %p25 = por %p23, %p24
    %p26 = scmp.ne.s32.totalorder %s18, %s20
    %p27 = scmp.eq.s32.totalorder %s15, 3
    %p28 = por %p26, %p27
    %p29 = scmp.ne.s32.totalorder %s20, %s21
    %p30 = scmp.eq.s32.totalorder %s15, 0
    %p31 = por %p29, %p30
    %p32 = scmp.ne.s32.totalorder %s20, %s21
    %p33 = scmp.eq.s32.totalorder %s16, 3
    %p34 = por %p32, %p33
    %p36 = scmp.ne.s32.totalorder %s21, %s35
    %p37 = scmp.eq.s32.totalorder %s16, 0
    %p38 = por %p36, %p37
    %s39 = ssub.s32 %s10, %s17
    %p40 = scmp.eq.s32.totalorder %s39, 0
    %s42 = sadd.s32 %s41, 1
    %s43 = scalar_select %p40, %s41, %s42
    %p46 = pneg %p40
    %p47 = scmp.eq.s32.totalorder %s10, 3
    %p48 = por %p46, %p47
    %p49 = scmp.ne.s32.totalorder %s41, %s44
    %p50 = scmp.eq.s32.totalorder %s10, 0
    %p51 = por %p49, %p50
    %p52 = scmp.ne.s32.totalorder %s41, %s44
    %p53 = scmp.eq.s32.totalorder %s15, 3
    %p54 = por %p52, %p53
    %p55 = scmp.ne.s32.totalorder %s44, %s45
    %p56 = scmp.eq.s32.totalorder %s15, 0
    %p57 = por %p55, %p56
    %p58 = scmp.ne.s32.totalorder %s44, %s45
    %p59 = scmp.eq.s32.totalorder %s16, 3
    %p60 = por %p58, %p59
    %p62 = scmp.ne.s32.totalorder %s45, %s61
    %p63 = scmp.eq.s32.totalorder %s16, 0
    %p64 = por %p62, %p63
    %s66 = sadd.s32 %s65, 1
    %p69 = scmp.eq.s32.totalorder %s10, 3
    %p70 = scmp.ne.s32.totalorder %s65, %s67
    %p71 = scmp.eq.s32.totalorder %s10, 0
    %p72 = por %p70, %p71
    %p73 = scmp.ne.s32.totalorder %s65, %s67
    %p74 = scmp.eq.s32.totalorder %s15, 3
    %p75 = por %p73, %p74
    %p76 = scmp.ne.s32.totalorder %s67, %s68
    %p77 = scmp.eq.s32.totalorder %s15, 0
    %p78 = por %p76, %p77
    %p79 = scmp.ne.s32.totalorder %s67, %s68
    %p80 = scmp.eq.s32.totalorder %s16, 3
    %p81 = por %p79, %p80
    %p83 = scmp.ne.s32.totalorder %s68, %s82
    %p84 = scmp.eq.s32.totalorder %s16, 0
    %p85 = por %p83, %p84
    %s86 = ssub.s32 %s10, %s17
    %p87 = scmp.eq.s32.totalorder %s86, 0
    %s89 = sadd.s32 %s88, 1
    %s90 = scalar_select %p87, %s88, %s89
    %p93 = pneg %p87
    %p94 = scmp.eq.s32.totalorder %s10, 3
    %p95 = por %p93, %p94
    %p96 = scmp.ne.s32.totalorder %s88, %s91
    %p97 = scmp.eq.s32.totalorder %s10, 0
    %p98 = por %p96, %p97
    %p99 = scmp.ne.s32.totalorder %s88, %s91
    %p100 = scmp.eq.s32.totalorder %s15, 3
    %p101 = por %p99, %p100
    %p102 = scmp.ne.s32.totalorder %s91, %s92
    %p103 = scmp.eq.s32.totalorder %s15, 0
    %p104 = por %p102, %p103
    %p105 = scmp.ne.s32.totalorder %s91, %s92
    %p106 = scmp.eq.s32.totalorder %s16, 3
    %p107 = por %p105, %p106
    %p109 = scmp.ne.s32.totalorder %s92, %s108
    %p110 = scmp.eq.s32.totalorder %s16, 0
    %p111 = por %p109, %p110
    %p112 = scmp.le.s32.totalorder 1, %s10
    %p113 = scmp.lt.s32.totalorder %s10, 5
    %p114 = pnand %p112, %p113
    %p115 = pneg %p114
    // Predicated region
    $region9: #{tpu_custom_call.1} parent=5 // pred_check
      _
    $region10: #{tpu_custom_call.1} parent=5 // pred_check_branch
      %117 = sbr.rel (%p114) target = $region12
    $region11: #{tpu_custom_call.1} parent=5 // pred_region
      %s118 = ssub.s32 %s10, 1
      // Predicated region
      $region13: #{tpu_custom_call.1} parent=11 // pred_check
        %p119 = pneg %p31
      $region14: #{tpu_custom_call.1} parent=11 // pred_check_branch
        %121 = sbr.rel (%p119) target = $region16
      $region15: #{tpu_custom_call.1} parent=11 // pred_region
        _
      $region16: #{tpu_custom_call.1} parent=11 // pred_fallthru
        _
      // Predicated region
      $region17: #{tpu_custom_call.1} parent=11 // pred_check
        %p122 = pneg %p78
      $region18: #{tpu_custom_call.1} parent=11 // pred_check_branch
        %124 = sbr.rel (%p122) target = $region20
      $region19: #{tpu_custom_call.1} parent=11 // pred_region
        _
      $region20: #{tpu_custom_call.1} parent=11 // pred_fallthru
        _
    $region12: #{tpu_custom_call.1} parent=5 // pred_fallthru
      _
    %p125 = scmp.lt.s32.totalorder %s10, 4
    // Predicated region
    $region21: #{tpu_custom_call.1} parent=5 // pred_check
      %p126 = pneg %p125
    $region22: #{tpu_custom_call.1} parent=5 // pred_check_branch
      %128 = sbr.rel (%p126) target = $region24
    $region23: #{tpu_custom_call.1} parent=5 // pred_region
      // Predicated region
      $region25: #{tpu_custom_call.1} parent=23 // pred_check
        %p129 = pneg %p51
      $region26: #{tpu_custom_call.1} parent=23 // pred_check_branch
        %131 = sbr.rel (%p129) target = $region28
      $region27: #{tpu_custom_call.1} parent=23 // pred_region
        %s132 = smul.u32 4, %s10
        %p133 = scmp.lt.s32.totalorder %s132, 15
        %s134 = scalar_select %p133, %s132, 15
        %s135 = smul.addr %s134, 8
        %s136 = scalar_lea.vmem %s1, %s135
        %s137 = smul.u32 4, %s10
      $region28: #{tpu_custom_call.1} parent=23 // pred_fallthru
        _
    $region24: #{tpu_custom_call.1} parent=5 // pred_fallthru
      _
    %p138 = scmp.le.s32.totalorder 1, %s10
    %p139 = scmp.lt.s32.totalorder %s10, 5
    %p140 = pnand %p138, %p139
    %p141 = pneg %p140
    // Predicated region
    $region29: #{tpu_custom_call.1} parent=5 // pred_check
      _
    $region30: #{tpu_custom_call.1} parent=5 // pred_check_branch
      %143 = sbr.rel (%p140) target = $region32
    $region31: #{tpu_custom_call.1} parent=5 // pred_region
      %s144 = ssub.s32 %s10, 1
      %p145 = pneg %p31
      %p146 = pneg %p28
      %s147 = smul.u32 4, %s15
      %p148 = scmp.lt.s32.totalorder %s147, 15
      %s149 = scalar_select %p148, %s147, 15
      %s150 = smul.addr %s149, 8
      %s151 = scalar_lea.vmem %s1, %s150
      %p152 = pneg %p57
      %p153 = pneg %p54
      %p154 = pneg %p78
      %p155 = pneg %p75
      %p156 = pneg %p104
      %p157 = pneg %p101
      %p158 = scmp.lt.s32.totalorder %s15, 3
      %s159 = scalar_select %p158, %s15, 3
      %s160 = smul.addr %s159, 4
      %s161 = scalar_lea.vmem %s3, %s160
      %s162 = smul.u32 4, %s15
      %p163 = scmp.lt.s32.totalorder %s162, 15
      %s164 = scalar_select %p163, %s162, 15
      %s165 = smul.addr %s164, 8
      %s166 = scalar_lea.vmem %s1, %s165
      %s167 = smul.u32 4, %s15
      %p168 = scmp.lt.s32.totalorder %s15, 3
      %s169 = scalar_select %p168, %s15, 3
      %s170 = smul.addr %s169, 4
      %s171 = scalar_lea.vmem %s3, %s170
      %s172 = sld [smem:[#allocation2]]
      %v173 = vld [vmem:[%s166] sm:$0xff]
      %v174 = vld [vmem:[%s166 + $0x8] sm:$0xff]
      %v175 = vld [vmem:[%s166 + $0x10] sm:$0xff]
      %v176 = vld [vmem:[%s166 + $0x18] sm:$0xff]
      %v177 = vld [vmem:[%s2] sm:$0xff]
      %v178 = vld [vmem:[%s2 + $0x8] sm:$0xff]
      %v179 = vld [vmem:[%s2 + $0x10] sm:$0xff]
      %v180 = vld [vmem:[%s2 + $0x18] sm:$0xff]
      %v181 = vld [vmem:[%s2 + $0x20] sm:$0xff]
      %v182 = vld [vmem:[%s2 + $0x28] sm:$0xff]
      %v183 = vld [vmem:[%s2 + $0x30] sm:$0xff]
      %v184 = vld [vmem:[%s2 + $0x38] sm:$0xff]
      %v185 = vld [vmem:[%s2 + $0x40] sm:$0xff]
      %v186 = vld [vmem:[%s2 + $0x48] sm:$0xff]
      %v187 = vld [vmem:[%s2 + $0x50] sm:$0xff]
      %v188 = vld [vmem:[%s2 + $0x58] sm:$0xff]
      %v189 = vld [vmem:[%s2 + $0x60] sm:$0xff]
      %v190 = vld [vmem:[%s2 + $0x68] sm:$0xff]
      %v191 = vld [vmem:[%s2 + $0x70] sm:$0xff]
      %v192 = vld [vmem:[%s2 + $0x78] sm:$0xff]
      %v193 = vstv %s172
      %v194 = vmul.f32 %v173, %v193
      %v195 = vmul.f32 %v174, %v193
      %v196 = vmul.f32 %v175, %v193
      %v197 = vmul.f32 %v176, %v193
      %vm198 = vcmask 523264
      %v200 = vsel %vm198, %v194, 0
      %v203 = vsel %vm198, %v195, 0
      %v206 = vsel %vm198, %v196, 0
      %v209 = vsel %vm198, %v197, 0
      %v212 = vsel %vm198, %v177, 0
      %v215 = vsel %vm198, %v178, 0
      %v218 = vsel %vm198, %v179, 0
      %v221 = vsel %vm198, %v180, 0
      %v224 = vsel %vm198, %v181, 0
      %v227 = vsel %vm198, %v182, 0
      %v230 = vsel %vm198, %v183, 0
      %v233 = vsel %vm198, %v184, 0
      %v236 = vsel %vm198, %v185, 0
      %v239 = vsel %vm198, %v186, 0
      %v242 = vsel %vm198, %v187, 0
      %v245 = vsel %vm198, %v188, 0
      %v248 = vsel %vm198, %v189, 0
      %v251 = vsel %vm198, %v190, 0
      %v254 = vsel %vm198, %v191, 0
      %v257 = vsel %vm198, %v192, 0
      %259 = vmatprep.subr.mxu0 0.0
      %260 = vmatpush1.xpose.msra.mxu0 %v212
      %261 = vmatprep.subr.mxu0 0.0
      %262 = vmatpush1.xpose.msra.mxu0 %v215
      %263 = vmatprep.subr.mxu0 0.0
      %264 = vmatpush1.xpose.msra.mxu0 %v218
      %265 = vmatprep.subr.mxu0 0.0
      %266 = vmatpush1.xpose.msra.mxu0 %v221
      %267 = vmatprep.subr.mxu0 0.0
      %268 = vmatpush1.xpose.msra.mxu0 %v224
      %269 = vmatprep.subr.mxu0 0.0
      %270 = vmatpush1.xpose.msra.mxu0 %v227
      %271 = vmatprep.subr.mxu0 0.0
      %272 = vmatpush1.xpose.msra.mxu0 %v230
      %273 = vmatprep.subr.mxu0 0.0
      %274 = vmatpush1.xpose.msra.mxu0 %v233
      %275 = vmatprep.subr.mxu0 0.0
      %276 = vmatpush1.xpose.msra.mxu0 %v236
      %277 = vmatprep.subr.mxu0 0.0
      %278 = vmatpush1.xpose.msra.mxu0 %v239
      %279 = vmatprep.subr.mxu0 0.0
      %280 = vmatpush1.xpose.msra.mxu0 %v242
      %281 = vmatprep.subr.mxu0 0.0
      %282 = vmatpush1.xpose.msra.mxu0 %v245
      %283 = vmatprep.subr.mxu0 0.0
      %284 = vmatpush1.xpose.msra.mxu0 %v248
      %285 = vmatprep.subr.mxu0 0.0
      %286 = vmatpush1.xpose.msra.mxu0 %v251
      %287 = vmatprep.subr.mxu0 0.0
      %288 = vmatpush1.xpose.msra.mxu0 %v254
      %289 = vmatprep.subr.mxu0 0.0
      %290 = vmatpush1.xpose.msra.mxu0 %v257
      %291 = vmatprep.subr.mxu0 0.0
      %292 = vmatpush1.xpose.msra.mxu0 0.0
      %293 = vmatprep.subr.mxu0 0.0
      %294 = vmatpush1.xpose.msra.mxu0 0.0
      %295 = vmatprep.subr.mxu0 0.0
      %296 = vmatpush1.xpose.msra.mxu0 0.0
      %297 = vmatprep.subr.mxu0 0.0
      %298 = vmatpush1.xpose.msra.mxu0 0.0
      %299 = vmatprep.subr.mxu0 0.0
      %300 = vmatpush1.xpose.msra.mxu0 0.0
      %301 = vmatprep.subr.mxu0 0.0
      %302 = vmatpush1.xpose.msra.mxu0 0.0
      %303 = vmatprep.subr.mxu0 0.0
      %304 = vmatpush1.xpose.msra.mxu0 0.0
      %305 = vmatprep.subr.mxu0 0.0
      %306 = vmatpush1.xpose.msra.mxu0 0.0
      %307 = vmatprep.subr.mxu0 0.0
      %308 = vmatpush1.xpose.msra.mxu0 0.0
      %309 = vmatprep.subr.mxu0 0.0
      %310 = vmatpush1.xpose.msra.mxu0 0.0
      %311 = vmatprep.subr.mxu0 0.0
      %312 = vmatpush1.xpose.msra.mxu0 0.0
      %313 = vmatprep.subr.mxu0 0.0
      %314 = vmatpush1.xpose.msra.mxu0 0.0
      %315 = vmatprep.subr.mxu0 0.0
      %316 = vmatpush1.xpose.msra.mxu0 0.0
      %317 = vmatprep.subr.mxu0 0.0
      %318 = vmatpush1.xpose.msra.mxu0 0.0
      %319 = vmatprep.subr.mxu0 0.0
      %320 = vmatpush1.xpose.msra.mxu0 0.0
      %321 = vmatprep.subr.mxu0 0.0
      %322 = vmatpush1.xpose.msra.mxu0 0.0
      %323 = vmatprep.mubr.f32.mxu0 0.0
      %324 = vmatmul.mubr.f32.gmra.mrb[0].mxu0 %v200
      %v325 = vpop.f32.mrb[0].mxu0
      %v326 = vadd.f32 0.0, %v325
      %v327 = vpop.f32.mrb[0].mxu0
      %328 = vmatprep.mubr.f32.mxu0 0.0
      %329 = vmatmul.mubr.f32.gmra.mrb[0].mxu0 %v203
      %v330 = vpop.f32.mrb[0].mxu0
      %v331 = vadd.f32 0.0, %v330
      %v332 = vpop.f32.mrb[0].mxu0
      %333 = vmatprep.mubr.f32.mxu0 0.0
      %334 = vmatmul.mubr.f32.gmra.mrb[0].mxu0 %v206
      %v335 = vpop.f32.mrb[0].mxu0
      %v336 = vadd.f32 0.0, %v335
      %v337 = vpop.f32.mrb[0].mxu0
      %338 = vmatprep.mubr.f32.mxu0 0.0
      %339 = vmatmul.mubr.f32.gmra.mrb[0].mxu0 %v209
      %v340 = vpop.f32.mrb[0].mxu0
      %v341 = vadd.f32 0.0, %v340
      %v342 = vpop.f32.mrb[0].mxu0
      %343 = vdwg.mxu0
      %344 = vmax.xlane.f32.xlu0 %v326
      %v345 = vpop.xlane.xlu0 %344
      %346 = vmax.xlane.f32.xlu0 %v331
      %v347 = vpop.xlane.xlu0 %346
      %348 = vmax.xlane.f32.xlu0 %v336
      %v349 = vpop.xlane.xlu0 %348
      %350 = vmax.xlane.f32.xlu0 %v341
      %v351 = vpop.xlane.xlu0 %350
      %v352 = vsub.f32 %v326, %v345
      %v353 = vsub.f32 %v331, %v347
      %v354 = vsub.f32 %v336, %v349
      %v355 = vsub.f32 %v341, %v351
      %v356 = vmul.f32 %v352, 1.442695
      %v357 = vpow.pop %v356
      %v358 = vmul.f32 %v353, 1.442695
      %v359 = vpow.pop %v358
      %v360 = vmul.f32 %v354, 1.442695
      %v361 = vpow.pop %v360
      %v362 = vmul.f32 %v355, 1.442695
      %v363 = vpow.pop %v362
      %364 = vadd.xlane.f32.xlu0 %v357
      %v365 = vpop.xlane.xlu0 %364
      %366 = vadd.xlane.f32.xlu0 %v359
      %v367 = vpop.xlane.xlu0 %366
      %368 = vadd.xlane.f32.xlu0 %v361
      %v369 = vpop.xlane.xlu0 %368
      %370 = vadd.xlane.f32.xlu0 %v363
      %v371 = vpop.xlane.xlu0 %370
      %v372 = vlog2.pop %v365
      %v373 = vmul.f32 %v372, 0.6931472
      %v374 = vlog2.pop %v367
      %v375 = vmul.f32 %v374, 0.6931472
      %v376 = vlog2.pop %v369
      %v377 = vmul.f32 %v376, 0.6931472
      %v378 = vlog2.pop %v371
      %v379 = vmul.f32 %v378, 0.6931472
      %v380 = vadd.f32 %v373, %v345
      %v381 = vadd.f32 %v375, %v347
      %v382 = vadd.f32 %v377, %v349
      %v383 = vadd.f32 %v379, %v351
      %v384 = vmax.f32 %v345, %v347
      %v385 = vmax.f32 %v349, %v351
      %v386 = vmax.f32 %v384, %v385
      %v387 = vrot.slane %v386, 4
      %v388 = vmax.f32 %v386, %v387
      %v389 = vrot.slane %v388, 2
      %v390 = vmax.f32 %v388, %v389
      %v391 = vrot.slane %v390, 1
      %v392 = vmax.f32 %v390, %v391
      %s393 = vtos %v392
      %v394 = vstv %s393
      %v395 = vsub.f32 %v345, %v394
      %v396 = vsub.f32 %v347, %v394
      %v397 = vsub.f32 %v349, %v394
      %v398 = vsub.f32 %v351, %v394
      %v399 = vmul.f32 %v395, 1.442695
      %v400 = vpow.pop %v399
      %v401 = vmul.f32 %v396, 1.442695
      %v402 = vpow.pop %v401
      %v403 = vmul.f32 %v397, 1.442695
      %v404 = vpow.pop %v403
      %v405 = vmul.f32 %v398, 1.442695
      %v406 = vpow.pop %v405
      %v411 = vlaneseq
      %v412 = vand.u32 %v411, 127
      %v413 = vlaneseq
      %v414 = vshrl.u32 %v413, 7
      %v415 = vsub.s32 %v412, %v414
      %v416 = vrot.slane %v400, %v415
      %v417 = vadd.s32 %v412, 4294967288
      %v418 = vlaneseq
      %v419 = vshrl.u32 %v418, 7
      %v420 = vsub.s32 %v417, %v419
      %v421 = vrot.slane %v402, %v420
      %vm422 = vcmask 130112
      %v423 = vsel %vm422, %v421, %v416
      %v424 = vadd.s32 %v412, 4294967280
      %v425 = vlaneseq
      %v426 = vshrl.u32 %v425, 7
      %v427 = vsub.s32 %v424, %v426
      %v428 = vrot.slane %v404, %v427
      %vm429 = vcmask 195712
      %v430 = vsel %vm429, %v428, %v423
      %v431 = vadd.s32 %v412, 4294967272
      %v432 = vlaneseq
      %v433 = vshrl.u32 %v432, 7
      %v434 = vsub.s32 %v431, %v433
      %v435 = vrot.slane %v406, %v434
      %vm436 = vcmask 261312
      %v437 = vsel %vm436, %v435, %v430
      %vm438 = vcmask 261120
      %v439 = vsel %vm438, %v437, 0
      %441 = vmatprep.subr.mxu0 0.0
      %442 = vmatpush1.msra.mxu0 %v357
      %443 = vmatprep.subr.mxu0 0.0
      %444 = vmatpush1.msra.mxu0 %v359
      %445 = vmatprep.subr.mxu0 0.0
      %446 = vmatpush1.msra.mxu0 %v361
      %447 = vmatprep.subr.mxu0 0.0
      %448 = vmatpush1.msra.mxu0 %v363
      %449 = vmatprep.subr.mxu0 0.0
      %450 = vmatpush1.msra.mxu0 0.0
      %451 = vmatprep.subr.mxu0 0.0
      %452 = vmatpush1.msra.mxu0 0.0
      %453 = vmatprep.subr.mxu0 0.0
      %454 = vmatpush1.msra.mxu0 0.0
      %455 = vmatprep.subr.mxu0 0.0
      %456 = vmatpush1.msra.mxu0 0.0
      %457 = vmatprep.subr.mxu0 0.0
      %458 = vmatpush1.msra.mxu0 0.0
      %459 = vmatprep.subr.mxu0 0.0
      %460 = vmatpush1.msra.mxu0 0.0
      %461 = vmatprep.subr.mxu0 0.0
      %462 = vmatpush1.msra.mxu0 0.0
      %463 = vmatprep.subr.mxu0 0.0
      %464 = vmatpush1.msra.mxu0 0.0
      %465 = vmatprep.subr.mxu0 0.0
      %466 = vmatpush1.msra.mxu0 0.0
      %467 = vmatprep.subr.mxu0 0.0
      %468 = vmatpush1.msra.mxu0 0.0
      %469 = vmatprep.subr.mxu0 0.0
      %470 = vmatpush1.msra.mxu0 0.0
      %471 = vmatprep.subr.mxu0 0.0
      %472 = vmatpush1.msra.mxu0 0.0
      %473 = vmatprep.subr.mxu0 0.0
      %474 = vmatpush1.msra.mxu0 0.0
      %475 = vmatprep.subr.mxu0 0.0
      %476 = vmatpush1.msra.mxu0 0.0
      %477 = vmatprep.subr.mxu0 0.0
      %478 = vmatpush1.msra.mxu0 0.0
      %479 = vmatprep.subr.mxu0 0.0
      %480 = vmatpush1.msra.mxu0 0.0
      %481 = vmatprep.subr.mxu0 0.0
      %482 = vmatpush1.msra.mxu0 0.0
      %483 = vmatprep.subr.mxu0 0.0
      %484 = vmatpush1.msra.mxu0 0.0
      %485 = vmatprep.subr.mxu0 0.0
      %486 = vmatpush1.msra.mxu0 0.0
      %487 = vmatprep.subr.mxu0 0.0
      %488 = vmatpush1.msra.mxu0 0.0
      %489 = vmatprep.subr.mxu0 0.0
      %490 = vmatpush1.msra.mxu0 0.0
      %491 = vmatprep.subr.mxu0 0.0
      %492 = vmatpush1.msra.mxu0 0.0
      %493 = vmatprep.subr.mxu0 0.0
      %494 = vmatpush1.msra.mxu0 0.0
      %495 = vmatprep.subr.mxu0 0.0
      %496 = vmatpush1.msra.mxu0 0.0
      %497 = vmatprep.subr.mxu0 0.0
      %498 = vmatpush1.msra.mxu0 0.0
      %499 = vmatprep.subr.mxu0 0.0
      %500 = vmatpush1.msra.mxu0 0.0
      %501 = vmatprep.subr.mxu0 0.0
      %502 = vmatpush1.msra.mxu0 0.0
      %503 = vmatprep.subr.mxu0 0.0
      %504 = vmatpush1.msra.mxu0 0.0
      %505 = vmatprep.mubr.f32.mxu0 0.0
      %506 = vmatmul.mubr.f32.gmra.mrb[0].mxu0 %v439
      %v507 = vpop.f32.mrb[0].mxu0
      %v508 = vadd.f32 0.0, %v507
      %v509 = vpop.f32.mrb[0].mxu0
      %510 = vdwg.mxu0
      %v511 = vlog2.pop %v508
      %v512 = vmul.f32 %v511, 0.6931472
      %v513 = vadd.f32 %v512, %v394
      %v514 = vmax.f32 %v326, %v331
      %v515 = vmax.f32 %v336, %v341
      %v516 = vmax.f32 %v514, %v515
      %v517 = vrot.slane %v516, 4
      %v518 = vmax.f32 %v516, %v517
      %v519 = vrot.slane %v518, 2
      %v520 = vmax.f32 %v518, %v519
      %v521 = vrot.slane %v520, 1
      %v522 = vmax.f32 %v520, %v521
      %s523 = smul.u32 %s15, 32
      %s524 = scalar_lea.vmem %s2, %s523
      %v525 = vld [vmem:[%s524] sm:$0xff]
      %v526 = vld [vmem:[%s524 + $0x8] sm:$0xff]
      %v527 = vld [vmem:[%s524 + $0x10] sm:$0xff]
      %v528 = vld [vmem:[%s524 + $0x18] sm:$0xff]
      %v529 = vmul.f32 %v173, %v525
      %v530 = vmul.f32 %v174, %v526
      %v531 = vmul.f32 %v175, %v527
      %v532 = vmul.f32 %v176, %v528
      %v533 = vsel %vm198, %v529, 0.0
      %534 = vadd.xlane.f32.xlu0 %v533
      %v535 = vpop.xlane.xlu0 %534
      %v536 = vsel %vm198, %v530, 0.0
      %537 = vadd.xlane.f32.xlu0 %v536
      %v538 = vpop.xlane.xlu0 %537
      %v539 = vsel %vm198, %v531, 0.0
      %540 = vadd.xlane.f32.xlu0 %v539
      %v541 = vpop.xlane.xlu0 %540
      %v542 = vsel %vm198, %v532, 0.0
      %543 = vadd.xlane.f32.xlu0 %v542
      %v544 = vpop.xlane.xlu0 %543
      %v545 = vmul.f32 %v193, %v535
      %v546 = vmul.f32 %v193, %v538
      %v547 = vmul.f32 %v193, %v541
      %v548 = vmul.f32 %v193, %v544
      %v549 = vadd.f32 %v380, %v381
      %v550 = vadd.f32 %v549, %v382
      %v551 = vadd.f32 %v550, %v383
      %v552 = vrot.slane %v551, 4
      %v553 = vadd.f32 %v551, %v552
      %v554 = vrot.slane %v553, 2
      %v555 = vadd.f32 %v553, %v554
      %v556 = vrot.slane %v555, 1
      %v557 = vadd.f32 %v555, %v556
      %v558 = vmul.f32 %v557, 0.5
      %v559 = vadd.f32 %v545, %v546
      %v560 = vadd.f32 %v559, %v547
      %v561 = vadd.f32 %v560, %v548
      %v562 = vrot.slane %v561, 4
      %v563 = vadd.f32 %v561, %v562
      %v564 = vrot.slane %v563, 2
      %v565 = vadd.f32 %v563, %v564
      %v566 = vrot.slane %v565, 1
      %v567 = vadd.f32 %v565, %v566
      %v568 = vsub.f32 %v558, %v567
      %vm569 = vcmask 1040384
      %v570 = vsel %vm569, %v513, %v522
      %vm571 = vcmask 1041408
      %v572 = vsel %vm571, %v570, %v568
      %573 = vst [vmem:[%s171] sm:$0x7] %v572
      %p574 = scmp.lt.s32.totalorder %s15, 3
      %s575 = scalar_select %p574, %s15, 3
      %s576 = smul.addr %s575, 4
      %s577 = scalar_lea.vmem %s3, %s576
      // Predicated region
      $region33: #{tpu_custom_call.1} parent=31 // pred_check
        %p578 = pneg %p101
      $region34: #{tpu_custom_call.1} parent=31 // pred_check_branch
        %580 = sbr.rel (%p578) target = $region36
      $region35: #{tpu_custom_call.1} parent=31 // pred_region
        _
      $region36: #{tpu_custom_call.1} parent=31 // pred_fallthru
        _
    $region32: #{tpu_custom_call.1} parent=5 // pred_fallthru
      _
    %p581 = scmp.le.s32.totalorder 2, %s10
    // Predicated region
    $region37: #{tpu_custom_call.1} parent=5 // pred_check
      %p582 = pneg %p581
    $region38: #{tpu_custom_call.1} parent=5 // pred_check_branch
      %584 = sbr.rel (%p582) target = $region40
    $region39: #{tpu_custom_call.1} parent=5 // pred_region
      %s585 = ssub.s32 %s10, 2
      // Predicated region
      $region41: #{tpu_custom_call.1} parent=39 // pred_check
        %p586 = pneg %p107
      $region42: #{tpu_custom_call.1} parent=39 // pred_check_branch
        %588 = sbr.rel (%p586) target = $region44
      $region43: #{tpu_custom_call.1} parent=39 // pred_region
        %p589 = scmp.lt.s32.totalorder %s16, 3
        %s590 = scalar_select %p589, %s16, 3
        %s591 = smul.addr %s590, 4
        %s592 = scalar_lea.vmem %s3, %s591
      $region44: #{tpu_custom_call.1} parent=39 // pred_fallthru
        _
    $region40: #{tpu_custom_call.1} parent=5 // pred_fallthru
      _
  $region6: #{tpu_custom_call.1} parent=0 // loop_footer
    %s14 = sadd.s32 1, %s10
  $region7: #{tpu_custom_call.1} parent=0 // loop_footer_branch
    %9 = sbr.rel target = $region3
  $region8: #{tpu_custom_call.1} parent=0 // loop_exit
    _

</llo_original>
